<compile_context>
chip_gen: v7x
topology: tpu7x:2x2x1
jax: 0.10.0
libtpu: 0.0.40
codegen_flags: <defaults>
</compile_context>

<pallas_src>
import functools

import jax
import jax.numpy as jnp
from jax import lax
from jax.experimental import pallas as pl
from jax.experimental.pallas import tpu as pltpu

_LANES = 128
_TILE_BYTES = 2 << 20          # ~2 MiB of VMEM per input tile (per buffer)
_VMEM_LIMIT = 32 << 20         # safe on v5e/v6e (128 MiB phys) and v7x (64 MiB)


def _round_up(x, m):
    return (x + m - 1) // m * m


def _pick_tile_rows(n_rows, n_cols, dtype, max_tile_rows=None):
    """Dtype/lane-padding-aware row-tile size (multiple of 8)."""
    itemsize = jnp.dtype(dtype).itemsize
    lane_padded = max(_round_up(n_cols, _LANES), _LANES)
    rows = _TILE_BYTES // (lane_padded * itemsize)
    rows = max(8, (rows // 8) * 8)
    if max_tile_rows is not None:
        rows = min(rows, max(8, _round_up(max_tile_rows, 8)))
    rows = min(rows, _round_up(n_rows, 8))
    return max(8, rows)


def _l2_partial_kernel(pred_ref, targ_ref, out_ref, *,
                       tiles_per_outer, tile_rows, n_valid_rows, needs_mask):
    """Accumulate sum((pred-targ)^2) reshaped to an (8, D) vector per outer chunk."""
    i = pl.program_id(1)

    @pl.when(i == 0)
    def _init():
        out_ref[...] = jnp.zeros_like(out_ref)

    d = pred_ref[...].astype(jnp.float32) - targ_ref[...].astype(jnp.float32)
    v = d * d
    if needs_mask:
        tile = pl.program_id(0) * tiles_per_outer + i
        row = tile * tile_rows + lax.broadcasted_iota(jnp.int32, v.shape, 0)
        v = jnp.where(row < n_valid_rows, v, 0.0)
    # (tile_rows, D) -> (tile_rows//8, 8, D) sum over axis 0: plain vreg adds,
    # no per-step cross-lane XLU reduce and no SMEM round trip.
    out_ref[...] += v.reshape(tile_rows // 8, 8, v.shape[-1]).sum(axis=0)[None]


def _weighted_l2_partial_kernel(pred_ref, targ_ref, w_ref, out_ref, *,
                                tiles_per_outer, tile_rows, n_valid_rows,
                                needs_mask):
    """Same as above with an elementwise weight block ((1,D)/(tile,1)/(tile,D))."""
    i = pl.program_id(1)

    @pl.when(i == 0)
    def _init():
        out_ref[...] = jnp.zeros_like(out_ref)

    d = pred_ref[...].astype(jnp.float32) - targ_ref[...].astype(jnp.float32)
    v = d * d * w_ref[...].astype(jnp.float32)   # broadcasts thin weight blocks
    if needs_mask:
        tile = pl.program_id(0) * tiles_per_outer + i
        row = tile * tile_rows + lax.broadcasted_iota(jnp.int32, v.shape, 0)
        v = jnp.where(row < n_valid_rows, v, 0.0)
    out_ref[...] += v.reshape(tile_rows // 8, 8, v.shape[-1]).sum(axis=0)[None]


def weighted_l2_loss(pred, targ, weights=1.0, *, max_tile_rows=None):
    """Pallas equivalent of WeightedL2.forward: mean((pred - targ)**2 * weights)."""
    assert pred.shape == targ.shape
    if pred.ndim != 2:
        # TODO(synk): non-2-D inputs fall back to a trailing-dim-preserving reshape.
        last = pred.shape[-1] if pred.ndim >= 1 else 1
        pred = pred.reshape(-1, last)
        targ = targ.reshape(-1, last)
    B, D = pred.shape
    total = B * D
    inv_count = 1.0 / float(total)

    # --- classify weights: never materialize a broadcast weights tensor. ---
    scalar_w = None
    w_arr = None
    if isinstance(weights, (int, float)):
        scalar_w = float(weights)
    else:
        w = jnp.asarray(weights)
        if w.size == 1:
            scalar_w = w.reshape(())
        elif w.ndim == 1 and w.shape[0] == D:
            w_arr = w.reshape(1, D)                 # per-dimension
        elif w.ndim == 2 and w.shape == (1, D):
            w_arr = w                               # per-dimension
        elif w.ndim == 2 and w.shape == (B, 1):
            w_arr = w                               # per-row (thin stream)
        elif w.shape == (B, D):
            w_arr = w                               # already full-sized
        else:
            # TODO(synk): uncommon broadcast shapes are materialized to full size.
            w_arr = jnp.broadcast_to(w, (B, D)).astype(jnp.float32)

    # --- tiling / grid ---
    tile_rows = _pick_tile_rows(B, D, pred.dtype, max_tile_rows)
    num_tiles = pl.cdiv(B, tile_rows)
    # Leading "parallel" axis: 2 outer chunks (dual TensorCore on v7x) when the
    # tile count splits evenly; otherwise a single chunk (no effect on v5e/v6e).
    n_outer = 2 if (num_tiles >= 2 and num_tiles % 2 == 0) else 1
    tiles_per_outer = num_tiles // n_outer
    needs_mask = (num_tiles * tile_rows != B)

    tiled_spec = pl.BlockSpec((tile_rows, D),
                              lambda o, i: (o * tiles_per_outer + i, 0))
    out_spec = pl.BlockSpec((1, 8, D), lambda o, i: (o, 0, 0))
    out_shape = jax.ShapeDtypeStruct((n_outer, 8, D), jnp.float32)
    compiler_params = pltpu.CompilerParams(
        dimension_semantics=("parallel", "arbitrary"),
        vmem_limit_bytes=_VMEM_LIMIT)

    common = dict(tiles_per_outer=tiles_per_outer, tile_rows=tile_rows,
                  n_valid_rows=B, needs_mask=needs_mask)
    out_bytes = n_outer * 8 * D * 4

    if w_arr is None:
        kernel = functools.partial(_l2_partial_kernel, **common)
        cost = pl.CostEstimate(
            flops=3 * total, transcendentals=0,
            bytes_accessed=int(pred.nbytes + targ.nbytes + out_bytes))
        partials = pl.pallas_call(
            kernel,
            out_shape=out_shape,
            grid=(n_outer, tiles_per_outer),
            in_specs=[tiled_spec, tiled_spec],
            out_specs=out_spec,
            compiler_params=compiler_params,
            cost_estimate=cost,
        )(pred, targ)
        loss = jnp.sum(partials) * inv_count
        if scalar_w is not None and not (isinstance(scalar_w, float) and scalar_w == 1.0):
            loss = loss * scalar_w
        return loss

    # Weighted (non-scalar) path: pick the thinnest BlockSpec for the weights.
    wr, wc = w_arr.shape
    if wr == 1:
        w_spec = pl.BlockSpec((1, D), lambda o, i: (0, 0))          # per-dim, resident
    elif wc == 1:
        w_spec = pl.BlockSpec((tile_rows, 1),
                              lambda o, i: (o * tiles_per_outer + i, 0))  # per-row
    else:
        w_spec = tiled_spec                                          # full tensor

    kernel = functools.partial(_weighted_l2_partial_kernel, **common)
    cost = pl.CostEstimate(
        flops=4 * total, transcendentals=0,
        bytes_accessed=int(pred.nbytes + targ.nbytes + w_arr.nbytes + out_bytes))
    partials = pl.pallas_call(
        kernel,
        out_shape=out_shape,
        grid=(n_outer, tiles_per_outer),
        in_specs=[tiled_spec, tiled_spec, w_spec],
        out_specs=out_spec,
        compiler_params=compiler_params,
        cost_estimate=cost,
    )(pred, targ, w_arr)
    return jnp.sum(partials) * inv_count


if __name__ == "__main__":
    key = jax.random.PRNGKey(0)
    ks = jax.random.split(key, 8)

    # Shapes implied by WeightedLoss.forward: pred/targ are [batch, action_dim].
    batch, action_dim = 8, 16
    pred = jax.random.normal(ks[0], (batch, action_dim), dtype=jnp.float32)
    targ = jax.random.normal(ks[1], (batch, action_dim), dtype=jnp.float32)
    w_full = jax.random.uniform(ks[2], (batch, action_dim), dtype=jnp.float32)
    w_dim = jax.random.uniform(ks[3], (action_dim,), dtype=jnp.float32)
    w_row = jax.random.uniform(ks[4], (batch, 1), dtype=jnp.float32)

    out_default = weighted_l2_loss(pred, targ)               # unit scalar weight
    out_scalar = weighted_l2_loss(pred, targ, 0.5)           # non-unit scalar
    out_full = weighted_l2_loss(pred, targ, w_full)          # full [B, D] weights
    out_dim = weighted_l2_loss(pred, targ, w_dim)            # per-dimension weights
    out_row = weighted_l2_loss(pred, targ, w_row)            # per-row weights

    # Larger batches: multi-tile grid + partial-tile masking (19 tiles, odd).
    b2, a2 = 600, 48
    pred_b = jax.random.normal(ks[5], (b2, a2), dtype=jnp.float32)
    targ_b = jax.random.normal(ks[6], (b2, a2), dtype=jnp.float32)
    out_masked = weighted_l2_loss(pred_b, targ_b, max_tile_rows=32)

    # Even tile count (16) -> 2 outer "parallel" chunks, plus per-dim weights.
    b3 = 512
    pred_c, targ_c = pred_b[:b3], targ_b[:b3]
    w_dim_c = jax.random.uniform(ks[7], (a2,), dtype=jnp.float32)
    out_par = weighted_l2_loss(pred_c, targ_c, w_dim_c, max_tile_rows=32)

    # bf16 inputs exercise the dtype-aware tile sizing + in-kernel f32 upcast.
    pred_bf = pred_b.astype(jnp.bfloat16)
    targ_bf = targ_b.astype(jnp.bfloat16)
    out_bf16 = weighted_l2_loss(pred_bf, targ_bf)

    jax.block_until_ready((out_default, out_scalar, out_full, out_dim, out_row,
                           out_masked, out_par, out_bf16))

    # Pure-JAX references.
    ref_default = jnp.mean((pred - targ) ** 2)
    ref_scalar = jnp.mean((pred - targ) ** 2 * 0.5)
    ref_full = jnp.mean((pred - targ) ** 2 * w_full)
    ref_dim = jnp.mean((pred - targ) ** 2 * w_dim)
    ref_row = jnp.mean((pred - targ) ** 2 * w_row)
    ref_masked = jnp.mean((pred_b - targ_b) ** 2)
    ref_par = jnp.mean((pred_c - targ_c) ** 2 * w_dim_c)
    d_bf = pred_bf.astype(jnp.float32) - targ_bf.astype(jnp.float32)
    ref_bf16 = jnp.mean(d_bf * d_bf)

    assert jnp.allclose(out_default, ref_default, rtol=1e-5, atol=1e-5)
    assert jnp.allclose(out_scalar, ref_scalar, rtol=1e-5, atol=1e-5)
    assert jnp.allclose(out_full, ref_full, rtol=1e-5, atol=1e-5)
    assert jnp.allclose(out_dim, ref_dim, rtol=1e-5, atol=1e-5)
    assert jnp.allclose(out_row, ref_row, rtol=1e-5, atol=1e-5)
    assert jnp.allclose(out_masked, ref_masked, rtol=1e-5, atol=1e-5)
    assert jnp.allclose(out_par, ref_par, rtol=1e-5, atol=1e-5)
    assert jnp.allclose(out_bf16, ref_bf16, rtol=1e-5, atol=1e-5)

    print("KERNEL_OK")
</pallas_src>

<mosaic_0001>
module attributes {stable_mosaic.version = 11 : i64} {
  func.func @_l2_partial_kernel(%arg0: i32, %arg1: i32, %arg2: memref<8x16xf32, #tpu.memory_space<vmem>>, %arg3: memref<8x16xf32, #tpu.memory_space<vmem>>, %arg4: memref<1x8x16xf32, #tpu.memory_space<vmem>>) attributes {dimension_semantics = [#tpu.dimension_semantics<parallel>, #tpu.dimension_semantics<arbitrary>], iteration_bounds = array<i64: 1, 1>, scalar_prefetch = 0 : i64, scratch_operands = 0 : i64, tpu.core_type = #tpu.core_type<tc>, window_params = [{transform_indices = @transform_0, window_bounds = array<i64: 8, 16>}, {transform_indices = @transform_1, window_bounds = array<i64: 8, 16>}, {transform_indices = @transform_2, window_bounds = array<i64: 1, 8, 16>}]} {
    %c0_i32 = arith.constant 0 : i32
    %0 = arith.cmpi eq, %arg1, %c0_i32 : i32
    %1 = arith.extui %0 : i1 to i32
    %c0_i32_0 = arith.constant 0 : i32
    %2 = arith.cmpi ne, %1, %c0_i32_0 : i32
    scf.if %2 {
      %cst_10 = arith.constant 0.000000e+00 : f32
      %13 = vector.broadcast %cst_10 : f32 to vector<1x8x16xf32>
      %c0_11 = arith.constant 0 : index
      %c0_12 = arith.constant 0 : index
      %c0_13 = arith.constant 0 : index
      %14 = vector.load %arg4[%c0_11, %c0_12, %c0_13] : memref<1x8x16xf32, #tpu.memory_space<vmem>>, vector<1x8x16xf32>
      tpu.vector_store %arg4[%c0_11, %c0_12, %c0_13], %13 {strides = array<i32>} : memref<1x8x16xf32, #tpu.memory_space<vmem>>, vector<1x8x16xf32>,
    } else {
    }
    %c0 = arith.constant 0 : index
    %c0_1 = arith.constant 0 : index
    %3 = vector.load %arg2[%c0, %c0_1] : memref<8x16xf32, #tpu.memory_space<vmem>>, vector<8x16xf32>
    %c0_2 = arith.constant 0 : index
    %c0_3 = arith.constant 0 : index
    %4 = vector.load %arg3[%c0_2, %c0_3] : memref<8x16xf32, #tpu.memory_space<vmem>>, vector<8x16xf32>
    %5 = arith.subf %3, %4 : vector<8x16xf32>
    %6 = arith.mulf %5, %5 : vector<8x16xf32>
    %c0_4 = arith.constant 0 : index
    %c0_5 = arith.constant 0 : index
    %c0_6 = arith.constant 0 : index
    %7 = vector.load %arg4[%c0_4, %c0_5, %c0_6] : memref<1x8x16xf32, #tpu.memory_space<vmem>>, vector<1x8x16xf32>
    %8 = vector.shape_cast %6 : vector<8x16xf32> to vector<1x8x16xf32>
    %cst = arith.constant dense<0.000000e+00> : vector<8x16xf32>
    %9 = vector.multi_reduction <add>, %8, %cst [0] : vector<1x8x16xf32> to vector<8x16xf32>
    %10 = vector.shape_cast %9 : vector<8x16xf32> to vector<1x8x16xf32>
    %11 = arith.addf %7, %10 : vector<1x8x16xf32>
    %c0_7 = arith.constant 0 : index
    %c0_8 = arith.constant 0 : index
    %c0_9 = arith.constant 0 : index
    %12 = vector.load %arg4[%c0_7, %c0_8, %c0_9] : memref<1x8x16xf32, #tpu.memory_space<vmem>>, vector<1x8x16xf32>
    tpu.vector_store %arg4[%c0_7, %c0_8, %c0_9], %11 {strides = array<i32>} : memref<1x8x16xf32, #tpu.memory_space<vmem>>, vector<1x8x16xf32>,
    return
  }
  func.func @transform_0(%arg0: i32, %arg1: i32) -> (i32, i32) {
    %c1_i32 = arith.constant 1 : i32
    %0 = arith.muli %arg0, %c1_i32 : i32
    %1 = arith.addi %0, %arg1 : i32
    %c0_i32 = arith.constant 0 : i32
    %c0_i32_0 = arith.constant 0 : i32
    return %1, %c0_i32 : i32, i32
  }
  func.func @transform_1(%arg0: i32, %arg1: i32) -> (i32, i32) {
    %c1_i32 = arith.constant 1 : i32
    %0 = arith.muli %arg0, %c1_i32 : i32
    %1 = arith.addi %0, %arg1 : i32
    %c0_i32 = arith.constant 0 : i32
    %c0_i32_0 = arith.constant 0 : i32
    return %1, %c0_i32 : i32, i32
  }
  func.func @transform_2(%arg0: i32, %arg1: i32) -> (i32, i32, i32) {
    %c0_i32 = arith.constant 0 : i32
    %c0_i32_0 = arith.constant 0 : i32
    %c0_i32_1 = arith.constant 0 : i32
    return %arg0, %c0_i32, %c0_i32_0 : i32, i32, i32
  }
}

</mosaic_0001>

<llo_original>
// kernel: tpu_custom_call.1
$region0: #{tpu_custom_call.1}
  #allocation0 [shape = 'u32[]', space=smem, size = 0x4, offset = 0x4, fixed_abs, tag = 'smem constant byte address 0x4 - core index']
  #allocation1 [shape = 'u32[144,128]{1,0:T(1,128)}', space=vmem, size = 0x12000, scoped, tag = 'internal scratch']
  %s0 = inlined_call_operand.hbm [shape: f32[8,16], index: 0, kind: input, shape index: {}]
  %s1 = inlined_call_operand.hbm [shape: f32[8,16], index: 1, kind: input, shape index: {}]
  %s2 = inlined_call_operand.hbm [shape: f32[1,8,16], index: 2, kind: output, shape index: {}]
  %s3 = sld [smem:[#allocation0]]
  $region30: #{tpu_custom_call.1} parent=0
    _
  %s5 = ssub.s32 1, %s3
  %s6 = scalar_select 0, %s5, %s3
  $region1: #{tpu_custom_call.1} parent=0
    #allocation2 [shape = 'u8[4096]{0}', space=vmem, size = 0x1000, scoped, tag = 'input window, operand 0, single buffered']
    #allocation3 [shape = 's32[1]{0}', space=sflag, size = 0x4, scoped, tag = 'scoped memory for tpu_custom_call.1']
    #allocation4 [shape = 's32[1]{0}', space=sflag, size = 0x4, scoped, tag = 'scoped memory for tpu_custom_call.1']
    #allocation5 [shape = 'u8[4096]{0}', space=vmem, size = 0x1000, scoped, tag = 'input window, operand 1, single buffered']
    #allocation6 [shape = 's32[1]{0}', space=sflag, size = 0x4, scoped, tag = 'scoped memory for tpu_custom_call.1']
    #allocation7 [shape = 'u8[4096]{0}', space=vmem, size = 0x1000, scoped, tag = 'output window, operand 0, single buffered']
    %7 = vsyncpa [#allocation3], 0
    %8 = vsyncpa [#allocation6], 0
    %9 = vsyncpa [#allocation4], 0
    // Predicated region
    $region2: #{tpu_custom_call.1} parent=1 // pred_check
      _
    $region3: #{tpu_custom_call.1} parent=1 // pred_check_branch
      %11 = sbr.rel (0) target = $region5
    $region4: #{tpu_custom_call.1} parent=1 // pred_region
      %s12 = sadd.s32 0, 0
      %s14 = ssub.s32 128, 128
      %15 = vsyncadd [#allocation3], %s14
      %s16 = smul.addr %s12, 128
      %s17 = scalar_lea.hbm %s0, %s16
      %s19 = sshll.u32 [#allocation2], 4
      %s20 = int_to_ptr.vmem [resolvable:$true] %s19
      %22 = dma.hbm_to_vmem [thread:$0]  %s17, 128, %s20, [#allocation3]
    $region5: #{tpu_custom_call.1} parent=1 // pred_fallthru
      _
    // Predicated region
    $region6: #{tpu_custom_call.1} parent=1 // pred_check
      _
    $region7: #{tpu_custom_call.1} parent=1 // pred_check_branch
      %24 = sbr.rel (0) target = $region9
    $region8: #{tpu_custom_call.1} parent=1 // pred_region
      %s25 = sadd.s32 0, 0
      %s27 = ssub.s32 128, 128
      %28 = vsyncadd [#allocation6], %s27
      %s29 = smul.addr %s25, 128
      %s30 = scalar_lea.hbm %s1, %s29
      %s32 = sshll.u32 [#allocation5], 4
      %s33 = int_to_ptr.vmem [resolvable:$true] %s32
      %35 = dma.hbm_to_vmem [thread:$0]  %s30, 128, %s33, [#allocation6]
    $region9: #{tpu_custom_call.1} parent=1 // pred_fallthru
      _
    // Predicated region
    $region10: #{tpu_custom_call.1} parent=1 // pred_check
      _
    $region11: #{tpu_custom_call.1} parent=1 // pred_check_branch
      %37 = sbr.rel (0) target = $region13
    $region12: #{tpu_custom_call.1} parent=1 // pred_region
      %38 = dma.done [#allocation3], 128
    $region13: #{tpu_custom_call.1} parent=1 // pred_fallthru
      _
    // Predicated region
    $region14: #{tpu_custom_call.1} parent=1 // pred_check
      _
    $region15: #{tpu_custom_call.1} parent=1 // pred_check_branch
      %40 = sbr.rel (0) target = $region17
    $region16: #{tpu_custom_call.1} parent=1 // pred_region
      %41 = dma.done [#allocation6], 128
    $region17: #{tpu_custom_call.1} parent=1 // pred_fallthru
      _
    %s42 = sadd.s32 0, 0
    %s43 = sadd.s32 0, 0
    %p44 = scmp.eq.s32.totalorder 0, 0
    // Predicated region
    $region18: #{tpu_custom_call.1} parent=1 // pred_check
      %p45 = pneg %p44
    $region19: #{tpu_custom_call.1} parent=1 // pred_check_branch
      %47 = sbr.rel (%p45) target = $region21
    $region20: #{tpu_custom_call.1} parent=1 // pred_region
      %vm48 = vcmask 130048
      %49 = vst.msk [vmem:[#allocation7] sm:$0xff] %vm48, 0.0
    $region21: #{tpu_custom_call.1} parent=1 // pred_fallthru
      _
    %v50 = vld [vmem:[#allocation2] sm:$0xff]
    %v51 = vld [vmem:[#allocation5] sm:$0xff]
    %v52 = vsub.f32 %v50, %v51
    %v53 = vmul.f32 %v52, %v52
    %v54 = vld [vmem:[#allocation7] sm:$0xff]
    %v55 = vadd.f32 %v53, 0.0
    %v56 = vadd.f32 %v54, %v55
    %vm57 = vcmask 130048
    %58 = vst.msk [vmem:[#allocation7] sm:$0xff] %vm57, %v56
    // Predicated region
    $region22: #{tpu_custom_call.1} parent=1 // pred_check
      _
    $region23: #{tpu_custom_call.1} parent=1 // pred_check_branch
      %60 = sbr.rel (0) target = $region25
    $region24: #{tpu_custom_call.1} parent=1 // pred_region
      %s62 = ssub.s32 128, 128
      %63 = vsyncadd [#allocation4], %s62
      %s65 = sshll.u32 [#allocation7], 4
      %s66 = int_to_ptr.vmem [resolvable:$true] %s65
      %68 = dma.vmem_to_hbm [thread:$0]  %s66, 128, %s2, [#allocation4]
    $region25: #{tpu_custom_call.1} parent=1 // pred_fallthru
      _
    // Predicated region
    $region26: #{tpu_custom_call.1} parent=1 // pred_check
      _
    $region27: #{tpu_custom_call.1} parent=1 // pred_check_branch
      %70 = sbr.rel (0) target = $region29
    $region28: #{tpu_custom_call.1} parent=1 // pred_region
      %71 = dma.done [#allocation4], 128
    $region29: #{tpu_custom_call.1} parent=1 // pred_fallthru
      _
    %72 = vsyncpa [#allocation3], 1
    %73 = vsyncpa [#allocation6], 1
    %74 = vsyncpa [#allocation4], 1

</llo_original>
